<compile_context>
chip_gen: v7x
topology: tpu7x:2x2x1
jax: 0.10.0
libtpu: 0.0.40
codegen_flags: <defaults>
</compile_context>

<pallas_src>
import jax
import jax.numpy as jnp
from jax.experimental import pallas as pl
from jax.experimental.pallas import tpu as pltpu


def _round_up(x, m):
    return ((x + m - 1) // m) * m


def encoder_kernel(x_ref, w1_ref, b1_ref, wh_ref, bh_ref, out_ref):
    # hidden = relu(x @ W1 + b1); MXU matmul with f32 accumulation.
    h = jnp.dot(x_ref[...], w1_ref[...], preferred_element_type=jnp.float32)
    h = jnp.maximum(h + b1_ref[...], 0.0)              # bias + ReLU in f32 (VPU)

    # Fused heads: ONE lane-dense matmul producing [mu | log_var | pad].
    o = jnp.dot(h.astype(wh_ref.dtype), wh_ref[...],
                preferred_element_type=jnp.float32)
    out_ref[...] = (o + bh_ref[...]).astype(out_ref.dtype)


def pack_encoder_params(w1, b1, wmu, bmu, wlv, blv, *,
                        compute_dtype=jnp.bfloat16):
    """One-time parameter prep, hoisted out of the per-call path:
      * fuse the two head projections into one lane-dense [H, ZP] slab
        (ZP = 2*Z rounded up to a multiple of 128, zero padded),
      * cast matmul inputs to the MXU-friendly compute dtype (default bf16),
      * keep biases in f32 (they are added to the f32 accumulator)."""
    D_in, H = w1.shape
    Z = wmu.shape[1]
    assert b1.shape == (1, H)
    assert wmu.shape == (H, Z) and wlv.shape == (H, Z)
    assert bmu.shape == (1, Z) and blv.shape == (1, Z)

    ZP = max(128, _round_up(2 * Z, 128))
    w_heads = jnp.pad(jnp.concatenate([wmu, wlv], axis=1),
                      ((0, 0), (0, ZP - 2 * Z)))
    b_heads = jnp.pad(jnp.concatenate([bmu, blv], axis=1),
                      ((0, 0), (0, ZP - 2 * Z)))

    params = dict(
        w1=w1.astype(compute_dtype),
        b1=b1.astype(jnp.float32),
        w_heads=w_heads.astype(compute_dtype),
        b_heads=b_heads.astype(jnp.float32),
    )
    meta = dict(D_in=D_in, H=H, Z=Z, ZP=ZP, compute_dtype=compute_dtype)
    return params, meta


def encoder_forward_packed(x, params, meta, *, tile_m=256):
    """x: [B, image_size] (any float dtype). Returns (mu, log_var) in f32."""
    B, D_in = x.shape
    H, Z, ZP = meta["H"], meta["Z"], meta["ZP"]
    compute_dtype = meta["compute_dtype"]
    assert D_in == meta["D_in"]

    xc = x.astype(compute_dtype)   # only per-call cast; NO batch padding copy

    # Batch tile: multiple of 8 sublanes, capped at tile_m. Guarantee >= 2 grid
    # steps when the batch allows it so "parallel" can actually shard across
    # the two TensorCores on v7x-class parts (free elsewhere).
    TM = min(tile_m, _round_up(B, 8))
    if B > 8 and pl.cdiv(B, TM) < 2:
        TM = max(8, _round_up(pl.cdiv(B, 2), 8))
    grid = (pl.cdiv(B, TM),)       # ragged last block handled by Pallas

    in_itemsize = jnp.dtype(compute_dtype).itemsize
    cost = pl.CostEstimate(
        flops=2 * B * (D_in * H + H * ZP),
        transcendentals=0,
        bytes_accessed=(B * D_in * in_itemsize        # x
                        + D_in * H * in_itemsize      # W1
                        + H * ZP * in_itemsize        # fused head weights
                        + (H + ZP) * 4                # biases (f32)
                        + B * ZP * 4),                # output (f32)
    )

    # VMEM budget: activation tiles double-buffered, resident weights single-
    # buffered when pl.Buffered is available. Raise the scoped limit if the
    # resident weights need it (v7x only has 64 MiB physical VMEM).
    have_buffered = hasattr(pl, "Buffered")
    wt_bufs = 1 if have_buffered else 2
    vmem_needed = int(1.25 * (
        wt_bufs * ((D_in * H + H * ZP) * in_itemsize + (H + ZP) * 4)
        + 2 * (TM * D_in * in_itemsize + TM * ZP * 4)))
    vmem_limit = min(64 << 20, max(32 << 20, vmem_needed))

    def build_call(single_buffer_weights):
        def wspec(shape):
            if single_buffer_weights:
                # Constant index_map -> one buffer is enough; halves the
                # resident-weight VMEM footprint.
                return pl.BlockSpec(shape, lambda i: (0, 0),
                                    pipeline_mode=pl.Buffered(1))
            return pl.BlockSpec(shape, lambda i: (0, 0))

        return pl.pallas_call(
            encoder_kernel,
            out_shape=jax.ShapeDtypeStruct((B, ZP), jnp.float32),
            grid=grid,
            in_specs=[
                pl.BlockSpec((TM, D_in), lambda i: (i, 0)),   # x: batch-tiled
                wspec((D_in, H)),                             # W1: resident
                wspec((1, H)),                                # b1: resident
                wspec((H, ZP)),                               # fused head W
                wspec((1, ZP)),                               # fused head bias
            ],
            out_specs=pl.BlockSpec((TM, ZP), lambda i: (i, 0)),
            compiler_params=pltpu.CompilerParams(
                dimension_semantics=("parallel",),
                vmem_limit_bytes=vmem_limit),
            cost_estimate=cost,
        )

    args = (xc, params["w1"], params["b1"], params["w_heads"],
            params["b_heads"])
    if have_buffered:
        try:
            out = build_call(True)(*args)
        except Exception:
            # pipeline_mode / Buffered(1) unsupported on this jax build ->
            # fall back to the default double-buffered resident weights.
            out = build_call(False)(*args)
    else:
        out = build_call(False)(*args)

    mu = out[:, :Z]
    log_var = out[:, Z:2 * Z]
    return mu, log_var


def encoder_forward(x, w1, b1, wmu, bmu, wlv, blv, *, tile_m=256,
                    compute_dtype=jnp.bfloat16):
    """Convenience wrapper (pack + forward). Prefer pack_encoder_params once
    and encoder_forward_packed per call (or jit this so XLA folds the pack)."""
    params, meta = pack_encoder_params(w1, b1, wmu, bmu, wlv, blv,
                                       compute_dtype=compute_dtype)
    return encoder_forward_packed(x, params, meta, tile_m=tile_m)


def init_linear(key, fan_in, fan_out):
    """PyTorch nn.Linear default init: U(-1/sqrt(fan_in), 1/sqrt(fan_in)).
    Returns W as [fan_in, fan_out] (pre-transposed) and b as [1, fan_out]."""
    kw, kb = jax.random.split(key)
    bound = 1.0 / jnp.sqrt(fan_in)
    w = jax.random.uniform(kw, (fan_in, fan_out), jnp.float32, -bound, bound)
    b = jax.random.uniform(kb, (1, fan_out), jnp.float32, -bound, bound)
    return w, b


if __name__ == "__main__":
    # Small shapes consistent with the module.
    B = 16            # batch (default tile logic -> 2 parallel grid steps)
    image_size = 256  # flattened image input dim
    hidden_dim = 128
    z_dim = 32

    key = jax.random.PRNGKey(0)
    kx, k1, k2, k3 = jax.random.split(key, 4)

    x = jax.random.normal(kx, (B, image_size), jnp.float32)
    w1, b1 = init_linear(k1, image_size, hidden_dim)
    wmu, bmu = init_linear(k2, hidden_dim, z_dim)
    wlv, blv = init_linear(k3, hidden_dim, z_dim)

    # One-time parameter packing (hoisted off the per-call path).
    params, meta = pack_encoder_params(w1, b1, wmu, bmu, wlv, blv,
                                       compute_dtype=jnp.bfloat16)
    mu, log_var = encoder_forward_packed(x, params, meta)
    jax.block_until_ready((mu, log_var))
    assert mu.shape == (B, z_dim) and log_var.shape == (B, z_dim)

    # Reference #1: same bf16 input rounding, f32 math (should match tightly).
    cd = jnp.bfloat16
    xb = x.astype(cd).astype(jnp.float32)
    w1b = w1.astype(cd).astype(jnp.float32)
    wmub = wmu.astype(cd).astype(jnp.float32)
    wlvb = wlv.astype(cd).astype(jnp.float32)
    h_ref = jnp.maximum(xb @ w1b + b1, 0.0)
    hb = h_ref.astype(cd).astype(jnp.float32)
    mu_ref = hb @ wmub + bmu
    lv_ref = hb @ wlvb + blv
    assert jnp.allclose(mu, mu_ref, atol=2e-3, rtol=2e-3)
    assert jnp.allclose(log_var, lv_ref, atol=2e-3, rtol=2e-3)

    # Reference #2: pure f32 module semantics (loose tol: bf16 input rounding).
    h_f32 = jnp.maximum(x @ w1 + b1, 0.0)
    mu_f32 = h_f32 @ wmu + bmu
    lv_f32 = h_f32 @ wlv + blv
    assert jnp.allclose(mu, mu_f32, atol=5e-2, rtol=5e-2)
    assert jnp.allclose(log_var, lv_f32, atol=5e-2, rtol=5e-2)

    print("KERNEL_OK")
</pallas_src>

<mosaic_0001>
module attributes {stable_mosaic.version = 11 : i64} {
  func.func @encoder_kernel(%arg0: i32, %arg1: memref<8x256xbf16, #tpu.memory_space<vmem>>, %arg2: memref<256x128xbf16, #tpu.memory_space<vmem>>, %arg3: memref<1x128xf32, #tpu.memory_space<vmem>>, %arg4: memref<128x128xbf16, #tpu.memory_space<vmem>>, %arg5: memref<1x128xf32, #tpu.memory_space<vmem>>, %arg6: memref<8x128xf32, #tpu.memory_space<vmem>>) attributes {dimension_semantics = [#tpu.dimension_semantics<parallel>], iteration_bounds = array<i64: 2>, scalar_prefetch = 0 : i64, scratch_operands = 0 : i64, tpu.core_type = #tpu.core_type<tc>, window_params = [{transform_indices = @transform_0, window_bounds = array<i64: 8, 256>}, {pipeline_mode = #tpu.pipeline_mode<synchronous>, transform_indices = @transform_1, window_bounds = array<i64: 256, 128>}, {pipeline_mode = #tpu.pipeline_mode<synchronous>, transform_indices = @transform_2, window_bounds = array<i64: 1, 128>}, {pipeline_mode = #tpu.pipeline_mode<synchronous>, transform_indices = @transform_3, window_bounds = array<i64: 128, 128>}, {pipeline_mode = #tpu.pipeline_mode<synchronous>, transform_indices = @transform_4, window_bounds = array<i64: 1, 128>}, {transform_indices = @transform_5, window_bounds = array<i64: 8, 128>}]} {
    %c0 = arith.constant 0 : index
    %c0_0 = arith.constant 0 : index
    %0 = vector.load %arg1[%c0, %c0_0] : memref<8x256xbf16, #tpu.memory_space<vmem>>, vector<8x256xbf16>
    %c0_1 = arith.constant 0 : index
    %c0_2 = arith.constant 0 : index
    %1 = vector.load %arg2[%c0_1, %c0_2] : memref<256x128xbf16, #tpu.memory_space<vmem>>, vector<256x128xbf16>
    %cst = arith.constant dense<0.000000e+00> : vector<8x128xf32>
    %2 = tpu.matmul %0, %1, %cst {dimension_numbers = #tpu.dot_dimension_numbers<[1], [0], [0], [1], [0, 0, 1, 1], [], []>} : vector<8x256xbf16>, vector<256x128xbf16>, vector<8x128xf32> -> vector<8x128xf32>
    %c0_3 = arith.constant 0 : index
    %c0_4 = arith.constant 0 : index
    %3 = vector.load %arg3[%c0_3, %c0_4] : memref<1x128xf32, #tpu.memory_space<vmem>>, vector<1x128xf32>
    %4 = vector.broadcast %3 : vector<1x128xf32> to vector<8x128xf32>
    %5 = arith.addf %2, %4 : vector<8x128xf32>
    %cst_5 = arith.constant 0.000000e+00 : f32
    %6 = vector.broadcast %cst_5 : f32 to vector<8x128xf32>
    %7 = arith.maximumf %5, %6 : vector<8x128xf32>
    %8 = arith.truncf %7 : vector<8x128xf32> to vector<8x128xbf16>
    %c0_6 = arith.constant 0 : index
    %c0_7 = arith.constant 0 : index
    %9 = vector.load %arg4[%c0_6, %c0_7] : memref<128x128xbf16, #tpu.memory_space<vmem>>, vector<128x128xbf16>
    %cst_8 = arith.constant dense<0.000000e+00> : vector<8x128xf32>
    %10 = tpu.matmul %8, %9, %cst_8 {dimension_numbers = #tpu.dot_dimension_numbers<[1], [0], [0], [1], [0, 0, 1, 1], [], []>} : vector<8x128xbf16>, vector<128x128xbf16>, vector<8x128xf32> -> vector<8x128xf32>
    %c0_9 = arith.constant 0 : index
    %c0_10 = arith.constant 0 : index
    %11 = vector.load %arg5[%c0_9, %c0_10] : memref<1x128xf32, #tpu.memory_space<vmem>>, vector<1x128xf32>
    %12 = vector.broadcast %11 : vector<1x128xf32> to vector<8x128xf32>
    %13 = arith.addf %10, %12 : vector<8x128xf32>
    %c0_11 = arith.constant 0 : index
    %c0_12 = arith.constant 0 : index
    %14 = vector.load %arg6[%c0_11, %c0_12] : memref<8x128xf32, #tpu.memory_space<vmem>>, vector<8x128xf32>
    tpu.vector_store %arg6[%c0_11, %c0_12], %13 {strides = array<i32>} : memref<8x128xf32, #tpu.memory_space<vmem>>, vector<8x128xf32>,
    return
  }
  func.func @transform_0(%arg0: i32) -> (i32, i32) {
    %c0_i32 = arith.constant 0 : i32
    %c0_i32_0 = arith.constant 0 : i32
    return %arg0, %c0_i32 : i32, i32
  }
  func.func @transform_1(%arg0: i32) -> (i32, i32) {
    %c0_i32 = arith.constant 0 : i32
    %c0_i32_0 = arith.constant 0 : i32
    %c0_i32_1 = arith.constant 0 : i32
    return %c0_i32, %c0_i32_0 : i32, i32
  }
  func.func @transform_2(%arg0: i32) -> (i32, i32) {
    %c0_i32 = arith.constant 0 : i32
    %c0_i32_0 = arith.constant 0 : i32
    %c0_i32_1 = arith.constant 0 : i32
    return %c0_i32, %c0_i32_0 : i32, i32
  }
  func.func @transform_3(%arg0: i32) -> (i32, i32) {
    %c0_i32 = arith.constant 0 : i32
    %c0_i32_0 = arith.constant 0 : i32
    %c0_i32_1 = arith.constant 0 : i32
    return %c0_i32, %c0_i32_0 : i32, i32
  }
  func.func @transform_4(%arg0: i32) -> (i32, i32) {
    %c0_i32 = arith.constant 0 : i32
    %c0_i32_0 = arith.constant 0 : i32
    %c0_i32_1 = arith.constant 0 : i32
    return %c0_i32, %c0_i32_0 : i32, i32
  }
  func.func @transform_5(%arg0: i32) -> (i32, i32) {
    %c0_i32 = arith.constant 0 : i32
    %c0_i32_0 = arith.constant 0 : i32
    return %arg0, %c0_i32 : i32, i32
  }
}

module attributes {stable_mosaic.version = 11 : i64} {
  func.func @encoder_kernel(%arg0: i32, %arg1: memref<8x256xbf16, #tpu.memory_space<vmem>>, %arg2: memref<256x128xbf16, #tpu.memory_space<vmem>>, %arg3: memref<1x128xf32, #tpu.memory_space<vmem>>, %arg4: memref<128x128xbf16, #tpu.memory_space<vmem>>, %arg5: memref<1x128xf32, #tpu.memory_space<vmem>>, %arg6: memref<8x128xf32, #tpu.memory_space<vmem>>) attributes {dimension_semantics = [#tpu.dimension_semantics<parallel>], iteration_bounds = array<i64: 2>, scalar_prefetch = 0 : i64, scratch_operands = 0 : i64, tpu.core_type = #tpu.core_type<tc>, window_params = [{transform_indices = @transform_0, window_bounds = array<i64: 8, 256>}, {pipeline_mode = #tpu.pipeline_mode<synchronous>, transform_indices = @transform_1, window_bounds = array<i64: 256, 128>}, {pipeline_mode = #tpu.pipeline_mode<synchronous>, transform_indices = @transform_2, window_bounds = array<i64: 1, 128>}, {pipeline_mode = #tpu.pipeline_mode<synchronous>, transform_indices = @transform_3, window_bounds = array<i64: 128, 128>}, {pipeline_mode = #tpu.pipeline_mode<synchronous>, transform_indices = @transform_4, window_bounds = array<i64: 1, 128>}, {transform_indices = @transform_5, window_bounds = array<i64: 8, 128>}]} {
    %c0 = arith.constant 0 : index
    %c0_0 = arith.constant 0 : index
    %0 = vector.load %arg1[%c0, %c0_0] : memref<8x256xbf16, #tpu.memory_space<vmem>>, vector<8x256xbf16>
    %c0_1 = arith.constant 0 : index
    %c0_2 = arith.constant 0 : index
    %1 = vector.load %arg2[%c0_1, %c0_2] : memref<256x128xbf16, #tpu.memory_space<vmem>>, vector<256x128xbf16>
    %cst = arith.constant dense<0.000000e+00> : vector<8x128xf32>
    %2 = tpu.matmul %0, %1, %cst {dimension_numbers = #tpu.dot_dimension_numbers<[1], [0], [0], [1], [0, 0, 1, 1], [], []>} : vector<8x256xbf16>, vector<256x128xbf16>, vector<8x128xf32> -> vector<8x128xf32>
    %c0_3 = arith.constant 0 : index
    %c0_4 = arith.constant 0 : index
    %3 = vector.load %arg3[%c0_3, %c0_4] : memref<1x128xf32, #tpu.memory_space<vmem>>, vector<1x128xf32>
    %4 = vector.broadcast %3 : vector<1x128xf32> to vector<8x128xf32>
    %5 = arith.addf %2, %4 : vector<8x128xf32>
    %cst_5 = arith.constant 0.000000e+00 : f32
    %6 = vector.broadcast %cst_5 : f32 to vector<8x128xf32>
    %7 = arith.maximumf %5, %6 : vector<8x128xf32>
    %8 = arith.truncf %7 : vector<8x128xf32> to vector<8x128xbf16>
    %c0_6 = arith.constant 0 : index
    %c0_7 = arith.constant 0 : index
    %9 = vector.load %arg4[%c0_6, %c0_7] : memref<128x128xbf16, #tpu.memory_space<vmem>>, vector<128x128xbf16>
    %cst_8 = arith.constant dense<0.000000e+00> : vector<8x128xf32>
    %10 = tpu.matmul %8, %9, %cst_8 {dimension_numbers = #tpu.dot_dimension_numbers<[1], [0], [0], [1], [0, 0, 1, 1], [], []>} : vector<8x128xbf16>, vector<128x128xbf16>, vector<8x128xf32> -> vector<8x128xf32>
    %c0_9 = arith.constant 0 : index
    %c0_10 = arith.constant 0 : index
    %11 = vector.load %arg5[%c0_9, %c0_10] : memref<1x128xf32, #tpu.memory_space<vmem>>, vector<1x128xf32>
    %12 = vector.broadcast %11 : vector<1x128xf32> to vector<8x128xf32>
    %13 = arith.addf %10, %12 : vector<8x128xf32>
    %c0_11 = arith.constant 0 : index
    %c0_12 = arith.constant 0 : index
    %14 = vector.load %arg6[%c0_11, %c0_12] : memref<8x128xf32, #tpu.memory_space<vmem>>, vector<8x128xf32>
    tpu.vector_store %arg6[%c0_11, %c0_12], %13 {strides = array<i32>} : memref<8x128xf32, #tpu.memory_space<vmem>>, vector<8x128xf32>,
    return
  }
  func.func @transform_0(%arg0: i32) -> (i32, i32) {
    %c0_i32 = arith.constant 0 : i32
    %c0_i32_0 = arith.constant 0 : i32
    return %arg0, %c0_i32 : i32, i32
  }
  func.func @transform_1(%arg0: i32) -> (i32, i32) {
    %c0_i32 = arith.constant 0 : i32
    %c0_i32_0 = arith.constant 0 : i32
    %c0_i32_1 = arith.constant 0 : i32
    return %c0_i32, %c0_i32_0 : i32, i32
  }
  func.func @transform_2(%arg0: i32) -> (i32, i32) {
    %c0_i32 = arith.constant 0 : i32
    %c0_i32_0 = arith.constant 0 : i32
    %c0_i32_1 = arith.constant 0 : i32
    return %c0_i32, %c0_i32_0 : i32, i32
  }
  func.func @transform_3(%arg0: i32) -> (i32, i32) {
    %c0_i32 = arith.constant 0 : i32
    %c0_i32_0 = arith.constant 0 : i32
    %c0_i32_1 = arith.constant 0 : i32
    return %c0_i32, %c0_i32_0 : i32, i32
  }
  func.func @transform_4(%arg0: i32) -> (i32, i32) {
    %c0_i32 = arith.constant 0 : i32
    %c0_i32_0 = arith.constant 0 : i32
    %c0_i32_1 = arith.constant 0 : i32
    return %c0_i32, %c0_i32_0 : i32, i32
  }
  func.func @transform_5(%arg0: i32) -> (i32, i32) {
    %c0_i32 = arith.constant 0 : i32
    %c0_i32_0 = arith.constant 0 : i32
    return %arg0, %c0_i32 : i32, i32
  }
}

</mosaic_0001>

<llo_original>
// kernel: tpu_custom_call.1
$region0: #{tpu_custom_call.1}
  #allocation0 [shape = 'u32[]', space=smem, size = 0x4, offset = 0x4, fixed_abs, tag = 'smem constant byte address 0x4 - core index']
  #allocation1 [shape = 'u32[144,128]{1,0:T(1,128)}', space=vmem, size = 0x12000, scoped, tag = 'internal scratch']
  %s0 = inlined_call_operand.hbm [shape: bf16[16,256], index: 0, kind: input, shape index: {}]
  %s1 = inlined_call_operand.hbm [shape: bf16[256,128], index: 1, kind: input, shape index: {}]
  %s2 = inlined_call_operand.vmem [shape: f32[1,128], index: 2, kind: input, shape index: {}]
  %s3 = inlined_call_operand.hbm [shape: bf16[128,128], index: 3, kind: input, shape index: {}]
  %s4 = inlined_call_operand.vmem [shape: f32[1,128], index: 4, kind: input, shape index: {}]
  %s5 = inlined_call_operand.hbm [shape: f32[16,128], index: 5, kind: output, shape index: {}]
  %s6 = sld [smem:[#allocation0]]
  $region65: #{tpu_custom_call.1} parent=0
    _
  %s8 = ssub.s32 1, %s6
  %s9 = scalar_select 0, %s8, %s6
  $region1: #{tpu_custom_call.1} parent=0
    #allocation2 [shape = 'u8[8192]{0}', space=vmem, size = 0x2000, scoped, tag = 'input window, operand 0']
    #allocation3 [shape = 's32[2]{0}', space=sflag, size = 0x8, scoped, tag = 'scoped memory for tpu_custom_call.1']
    #allocation4 [shape = 's32[2]{0}', space=sflag, size = 0x8, scoped, tag = 'scoped memory for tpu_custom_call.1']
    #allocation5 [shape = 'u8[65536]{0}', space=vmem, size = 0x10000, scoped, tag = 'input window, operand 1, single buffered']
    #allocation6 [shape = 's32[1]{0}', space=sflag, size = 0x4, scoped, tag = 'scoped memory for tpu_custom_call.1']
    #allocation7 [shape = 'u8[32768]{0}', space=vmem, size = 0x8000, scoped, tag = 'input window, operand 3, single buffered']
    #allocation8 [shape = 'u8[8192]{0}', space=vmem, size = 0x2000, scoped, tag = 'output window, operand 0']
    %10 = vsyncpa [#allocation3], 0
    %s11 = scalar_lea.sflag [#allocation3], 1
    %12 = vsyncpa %s11, 0
    %13 = vsyncpa [#allocation6], 0
    %14 = vsyncpa [#allocation4], 0
    %s15 = scalar_lea.sflag [#allocation4], 1
    %16 = vsyncpa %s15, 0
    loop: start=0, step=1, limit=4
    $region2: #{tpu_custom_call.1} parent=1 // loop_pre_header
      _
    $region3: #{tpu_custom_call.1} parent=1 // loop_header
      %s18 = sphi 0, %s22
      %p19 = scmp.ge.s32.totalorder %s18, 4
      %s28 = sphi 0, %s30
      %s31 = sphi 0, %s28
      %s32 = sphi 0, %s31
      %s48 = sphi 0, %s32
      %s52 = sphi 0, %s52
      %s54 = sphi 0, %s52
      %s55 = sphi 0, %s54
      %s69 = sphi 0, %s55
      %s73 = sphi 0, %s73
      %s75 = sphi 0, %s73
      %s76 = sphi 0, %s75
      %s90 = sphi 0, %s76
      %s94 = sphi 0, %s94
      %s96 = sphi 0, %s94
      %s97 = sphi 0, %s96
      %s111 = sphi 0, %s97
      %s115 = sphi 0, %s115
      %s117 = sphi 0, %s115
      %s118 = sphi 0, %s117
      %s132 = sphi 0, %s118
      %s138 = sphi 0, %s140
      %s141 = sphi 0, %s138
      %s142 = sphi 0, %s141
      %s158 = sphi 0, %s142
    $region4: #{tpu_custom_call.1} parent=1 // loop_header_branch
      %21 = sbr.rel (%p19) target = $region8
    $region5: #{tpu_custom_call.1} parent=1 // loop_body
      %s23 = ssub.s32 %s18, 1
      %s24 = ssub.s32 %s18, 2
      %s25 = sadd.s32 %s18, 1
      %s26 = ssub.s32 %s18, %s25
      %p27 = scmp.eq.s32.totalorder %s26, 0
      %s29 = sadd.s32 %s28, 1
      %s30 = scalar_select %p27, %s28, %s29
      %p33 = pneg %p27
      %p34 = scmp.eq.s32.totalorder %s18, 1
      %p35 = por %p33, %p34
      %p36 = scmp.ne.s32.totalorder %s28, %s31
      %p37 = scmp.eq.s32.totalorder %s18, 0
      %p38 = por %p36, %p37
      %p39 = scmp.ne.s32.totalorder %s28, %s31
      %p40 = scmp.eq.s32.totalorder %s23, 1
      %p41 = por %p39, %p40
      %p42 = scmp.ne.s32.totalorder %s31, %s32
      %p43 = scmp.eq.s32.totalorder %s23, 0
      %p44 = por %p42, %p43
      %p45 = scmp.ne.s32.totalorder %s31, %s32
      %p46 = scmp.eq.s32.totalorder %s24, 1
      %p47 = por %p45, %p46
      %p49 = scmp.ne.s32.totalorder %s32, %s48
      %p50 = scmp.eq.s32.totalorder %s24, 0
      %p51 = por %p49, %p50
      %s53 = sadd.s32 %s52, 1
      %p56 = scmp.eq.s32.totalorder %s18, 1
      %p57 = scmp.ne.s32.totalorder %s52, %s54
      %p58 = scmp.eq.s32.totalorder %s18, 0
      %p59 = por %p57, %p58
      %p60 = scmp.ne.s32.totalorder %s52, %s54
      %p61 = scmp.eq.s32.totalorder %s23, 1
      %p62 = por %p60, %p61
      %p63 = scmp.ne.s32.totalorder %s54, %s55
      %p64 = scmp.eq.s32.totalorder %s23, 0
      %p65 = por %p63, %p64
      %p66 = scmp.ne.s32.totalorder %s54, %s55
      %p67 = scmp.eq.s32.totalorder %s24, 1
      %p68 = por %p66, %p67
      %p70 = scmp.ne.s32.totalorder %s55, %s69
      %p71 = scmp.eq.s32.totalorder %s24, 0
      %p72 = por %p70, %p71
      %s74 = sadd.s32 %s73, 1
      %p77 = scmp.eq.s32.totalorder %s18, 1
      %p78 = scmp.ne.s32.totalorder %s73, %s75
      %p79 = scmp.eq.s32.totalorder %s18, 0
      %p80 = por %p78, %p79
      %p81 = scmp.ne.s32.totalorder %s73, %s75
      %p82 = scmp.eq.s32.totalorder %s23, 1
      %p83 = por %p81, %p82
      %p84 = scmp.ne.s32.totalorder %s75, %s76
      %p85 = scmp.eq.s32.totalorder %s23, 0
      %p86 = por %p84, %p85
      %p87 = scmp.ne.s32.totalorder %s75, %s76
      %p88 = scmp.eq.s32.totalorder %s24, 1
      %p89 = por %p87, %p88
      %p91 = scmp.ne.s32.totalorder %s76, %s90
      %p92 = scmp.eq.s32.totalorder %s24, 0
      %p93 = por %p91, %p92
      %s95 = sadd.s32 %s94, 1
      %p98 = scmp.eq.s32.totalorder %s18, 1
      %p99 = scmp.ne.s32.totalorder %s94, %s96
      %p100 = scmp.eq.s32.totalorder %s18, 0
      %p101 = por %p99, %p100
      %p102 = scmp.ne.s32.totalorder %s94, %s96
      %p103 = scmp.eq.s32.totalorder %s23, 1
      %p104 = por %p102, %p103
      %p105 = scmp.ne.s32.totalorder %s96, %s97
      %p106 = scmp.eq.s32.totalorder %s23, 0
      %p107 = por %p105, %p106
      %p108 = scmp.ne.s32.totalorder %s96, %s97
      %p109 = scmp.eq.s32.totalorder %s24, 1
      %p110 = por %p108, %p109
      %p112 = scmp.ne.s32.totalorder %s97, %s111
      %p113 = scmp.eq.s32.totalorder %s24, 0
      %p114 = por %p112, %p113
      %s116 = sadd.s32 %s115, 1
      %p119 = scmp.eq.s32.totalorder %s18, 1
      %p120 = scmp.ne.s32.totalorder %s115, %s117
      %p121 = scmp.eq.s32.totalorder %s18, 0
      %p122 = por %p120, %p121
      %p123 = scmp.ne.s32.totalorder %s115, %s117
      %p124 = scmp.eq.s32.totalorder %s23, 1
      %p125 = por %p123, %p124
      %p126 = scmp.ne.s32.totalorder %s117, %s118
      %p127 = scmp.eq.s32.totalorder %s23, 0
      %p128 = por %p126, %p127
      %p129 = scmp.ne.s32.totalorder %s117, %s118
      %p130 = scmp.eq.s32.totalorder %s24, 1
      %p131 = por %p129, %p130
      %p133 = scmp.ne.s32.totalorder %s118, %s132
      %p134 = scmp.eq.s32.totalorder %s24, 0
      %p135 = por %p133, %p134
      %s136 = ssub.s32 %s18, %s25
      %p137 = scmp.eq.s32.totalorder %s136, 0
      %s139 = sadd.s32 %s138, 1
      %s140 = scalar_select %p137, %s138, %s139
      %p143 = pneg %p137
      %p144 = scmp.eq.s32.totalorder %s18, 1
      %p145 = por %p143, %p144
      %p146 = scmp.ne.s32.totalorder %s138, %s141
      %p147 = scmp.eq.s32.totalorder %s18, 0
      %p148 = por %p146, %p147
      %p149 = scmp.ne.s32.totalorder %s138, %s141
      %p150 = scmp.eq.s32.totalorder %s23, 1
      %p151 = por %p149, %p150
      %p152 = scmp.ne.s32.totalorder %s141, %s142
      %p153 = scmp.eq.s32.totalorder %s23, 0
      %p154 = por %p152, %p153
      %p155 = scmp.ne.s32.totalorder %s141, %s142
      %p156 = scmp.eq.s32.totalorder %s24, 1
      %p157 = por %p155, %p156
      %p159 = scmp.ne.s32.totalorder %s142, %s158
      %p160 = scmp.eq.s32.totalorder %s24, 0
      %p161 = por %p159, %p160
      %p162 = scmp.le.s32.totalorder 1, %s18
      %p163 = scmp.lt.s32.totalorder %s18, 3
      %p164 = pnand %p162, %p163
      %p165 = pneg %p164
      // Predicated region
      $region9: #{tpu_custom_call.1} parent=5 // pred_check
        _
      $region10: #{tpu_custom_call.1} parent=5 // pred_check_branch
        %167 = sbr.rel (%p164) target = $region12
      $region11: #{tpu_custom_call.1} parent=5 // pred_region
        %s168 = ssub.s32 %s18, 1
        // Predicated region
        $region13: #{tpu_custom_call.1} parent=11 // pred_check
          %p169 = pneg %p65
        $region14: #{tpu_custom_call.1} parent=11 // pred_check_branch
          %171 = sbr.rel (%p169) target = $region16
        $region15: #{tpu_custom_call.1} parent=11 // pred_region
          %s173 = ssub.s32 2048, 2048
          %174 = vsyncadd [#allocation6], %s173
          %s175 = sshll.u32 [#allocation5], 4
          %s176 = int_to_ptr.vmem [resolvable:$true] %s175
          %181 = dma.hbm_to_vmem [thread:$0]  %s1, 2048, %s176, [#allocation6], 64, 64, 4
        $region16: #{tpu_custom_call.1} parent=11 // pred_fallthru
          _
        // Predicated region
        $region17: #{tpu_custom_call.1} parent=11 // pred_check
          %p182 = pneg %p86
        $region18: #{tpu_custom_call.1} parent=11 // pred_check_branch
          %184 = sbr.rel (%p182) target = $region20
        $region19: #{tpu_custom_call.1} parent=11 // pred_region
          _
        $region20: #{tpu_custom_call.1} parent=11 // pred_fallthru
          _
        // Predicated region
        $region21: #{tpu_custom_call.1} parent=11 // pred_check
          %p185 = pneg %p107
        $region22: #{tpu_custom_call.1} parent=11 // pred_check_branch
          %187 = sbr.rel (%p185) target = $region24
        $region23: #{tpu_custom_call.1} parent=11 // pred_region
          %s189 = ssub.s32 1024, 1024
          %190 = vsyncadd [#allocation6], %s189
          %s191 = sshll.u32 [#allocation7], 4
          %s192 = int_to_ptr.vmem [resolvable:$true] %s191
          %197 = dma.hbm_to_vmem [thread:$0]  %s3, 1024, %s192, [#allocation6], 64, 64, 4
        $region24: #{tpu_custom_call.1} parent=11 // pred_fallthru
          _
        // Predicated region
        $region25: #{tpu_custom_call.1} parent=11 // pred_check
          %p198 = pneg %p128
        $region26: #{tpu_custom_call.1} parent=11 // pred_check_branch
          %200 = sbr.rel (%p198) target = $region28
        $region27: #{tpu_custom_call.1} parent=11 // pred_region
          _
        $region28: #{tpu_custom_call.1} parent=11 // pred_fallthru
          _
      $region12: #{tpu_custom_call.1} parent=5 // pred_fallthru
        _
      %p201 = scmp.lt.s32.totalorder %s18, 2
      // Predicated region
      $region29: #{tpu_custom_call.1} parent=5 // pred_check
        %p202 = pneg %p201
      $region30: #{tpu_custom_call.1} parent=5 // pred_check_branch
        %204 = sbr.rel (%p202) target = $region32
      $region31: #{tpu_custom_call.1} parent=5 // pred_region
        // Predicated region
        $region33: #{tpu_custom_call.1} parent=31 // pred_check
          %p205 = pneg %p38
        $region34: #{tpu_custom_call.1} parent=31 // pred_check_branch
          %207 = sbr.rel (%p205) target = $region36
        $region35: #{tpu_custom_call.1} parent=31 // pred_region
          %s208 = sand.u32 %s28, 1
          %s209 = scalar_lea.sflag [#allocation3], %s208
          %s210 = sand.u32 %s28, 1
          %s211 = smul.addr %s210, 8
          %s212 = scalar_lea.vmem [#allocation2], %s211
          %s214 = ssub.s32 128, 128
          %215 = vsyncadd %s209, %s214
          %s216 = smul.addr %s18, 2
          %s217 = smul.addr %s216, 64
          %s218 = scalar_lea.hbm %s0, %s217
          %s220 = sshll.u32 %s212, 4
          %s221 = int_to_ptr.vmem [resolvable:$true] %s220
          %223 = dma.hbm_to_vmem [thread:$0]  %s218, 128, %s221, %s209
        $region36: #{tpu_custom_call.1} parent=31 // pred_fallthru
          _
      $region32: #{tpu_custom_call.1} parent=5 // pred_fallthru
        _
      %p224 = scmp.le.s32.totalorder 1, %s18
      %p225 = scmp.lt.s32.totalorder %s18, 3
      %p226 = pnand %p224, %p225
      %p227 = pneg %p226
      // Predicated region
      $region37: #{tpu_custom_call.1} parent=5 // pred_check
        _
      $region38: #{tpu_custom_call.1} parent=5 // pred_check_branch
        %229 = sbr.rel (%p226) target = $region40
      $region39: #{tpu_custom_call.1} parent=5 // pred_region
        %s230 = ssub.s32 %s18, 1
        %s231 = sand.u32 %s31, 1
        %s232 = scalar_lea.sflag [#allocation3], %s231
        %s233 = sand.u32 %s31, 1
        %s234 = smul.addr %s233, 8
        %s235 = scalar_lea.vmem [#allocation2], %s234
        // Predicated region
        $region41: #{tpu_custom_call.1} parent=39 // pred_check
          %p236 = pneg %p44
        $region42: #{tpu_custom_call.1} parent=39 // pred_check_branch
          %238 = sbr.rel (%p236) target = $region44
        $region43: #{tpu_custom_call.1} parent=39 // pred_region
          %239 = dma.done %s232, 128
        $region44: #{tpu_custom_call.1} parent=39 // pred_fallthru
          _
        // Predicated region
        $region45: #{tpu_custom_call.1} parent=39 // pred_check
          %p240 = pneg %p65
        $region46: #{tpu_custom_call.1} parent=39 // pred_check_branch
          %242 = sbr.rel (%p240) target = $region48
        $region47: #{tpu_custom_call.1} parent=39 // pred_region
          %243 = dma.done [#allocation6], 2048
        $region48: #{tpu_custom_call.1} parent=39 // pred_fallthru
          _
        // Predicated region
        $region49: #{tpu_custom_call.1} parent=39 // pred_check
          %p244 = pneg %p107
        $region50: #{tpu_custom_call.1} parent=39 // pred_check_branch
          %246 = sbr.rel (%p244) target = $region52
        $region51: #{tpu_custom_call.1} parent=39 // pred_region
          %247 = dma.done [#allocation6], 1024
        $region52: #{tpu_custom_call.1} parent=39 // pred_fallthru
          _
        %s248 = sand.u32 %s31, 1
        %s249 = scalar_lea.sflag [#allocation3], %s248
        %s250 = sand.u32 %s31, 1
        %s251 = smul.addr %s250, 8
        %s252 = scalar_lea.vmem [#allocation2], %s251
        %p253 = pneg %p44
        %p254 = pneg %p41
        %p255 = pneg %p65
        %p256 = pneg %p62
        %p257 = pneg %p86
        %p258 = pneg %p83
        %p259 = pneg %p107
        %p260 = pneg %p104
        %p261 = pneg %p128
        %p262 = pneg %p125
        %p263 = pneg %p154
        %p264 = pneg %p151
        %s265 = sand.u32 %s141, 1
        %s266 = scalar_lea.sflag [#allocation4], %s265
        %s267 = sand.u32 %s141, 1
        %s268 = smul.addr %s267, 8
        %s269 = scalar_lea.vmem [#allocation8], %s268
        %v271 = vld [vmem:[%s235] sm:$0xff]
        %v272 = vld [vmem:[#allocation5] sm:$0xf]
        %v273 = vld [vmem:[#allocation5 + $0x4] sm:$0xf]
        %v274 = vld [vmem:[#allocation5 + $0x8] sm:$0xf]
        %v275 = vld [vmem:[#allocation5 + $0xc] sm:$0xf]
        %v276 = vld [vmem:[#allocation5 + $0x10] sm:$0xf]
        %v277 = vld [vmem:[#allocation5 + $0x14] sm:$0xf]
        %v278 = vld [vmem:[#allocation5 + $0x18] sm:$0xf]
        %v279 = vld [vmem:[#allocation5 + $0x1c] sm:$0xf]
        %v280 = vld [vmem:[#allocation5 + $0x20] sm:$0xf]
        %v281 = vld [vmem:[#allocation5 + $0x24] sm:$0xf]
        %v282 = vld [vmem:[#allocation5 + $0x28] sm:$0xf]
        %v283 = vld [vmem:[#allocation5 + $0x2c] sm:$0xf]
        %v284 = vld [vmem:[#allocation5 + $0x30] sm:$0xf]
        %v285 = vld [vmem:[#allocation5 + $0x34] sm:$0xf]
        %v286 = vld [vmem:[#allocation5 + $0x38] sm:$0xf]
        %v287 = vld [vmem:[#allocation5 + $0x3c] sm:$0xf]
        %v288 = vld [vmem:[#allocation5 + $0x40] sm:$0xf]
        %v289 = vld [vmem:[#allocation5 + $0x44] sm:$0xf]
        %v290 = vld [vmem:[#allocation5 + $0x48] sm:$0xf]
        %v291 = vld [vmem:[#allocation5 + $0x4c] sm:$0xf]
        %v292 = vld [vmem:[#allocation5 + $0x50] sm:$0xf]
        %v293 = vld [vmem:[#allocation5 + $0x54] sm:$0xf]
        %v294 = vld [vmem:[#allocation5 + $0x58] sm:$0xf]
        %v295 = vld [vmem:[#allocation5 + $0x5c] sm:$0xf]
        %v296 = vld [vmem:[#allocation5 + $0x60] sm:$0xf]
        %v297 = vld [vmem:[#allocation5 + $0x64] sm:$0xf]
        %v298 = vld [vmem:[#allocation5 + $0x68] sm:$0xf]
        %v299 = vld [vmem:[#allocation5 + $0x6c] sm:$0xf]
        %v300 = vld [vmem:[#allocation5 + $0x70] sm:$0xf]
        %v301 = vld [vmem:[#allocation5 + $0x74] sm:$0xf]
        %v302 = vld [vmem:[#allocation5 + $0x78] sm:$0xf]
        %v303 = vld [vmem:[#allocation5 + $0x7c] sm:$0xf]
        %v304 = vld [vmem:[%s2] sm:$0x1]
        %v306 = vlaneseq
        %v307 = vshrl.u32 %v306, 7
        %v308 = vsub.s32 0, %v307
        %v309 = vrot.slane %v304, %v308
        %v312 = vunpack.c.l.b16 %v271
        %v313 = vunpack.c.h.b16 %v271
        %v314 = vpack.c.b16 %v312, %v312
        %v315 = vpack.c.b16 %v313, %v313
        %v350 = vunpack.c.l.b16 %v272
        %v351 = vunpack.c.l.b16 %v273
        %v352 = vunpack.c.l.b16 %v274
        %v353 = vunpack.c.l.b16 %v275
        %v354 = vunpack.c.l.b16 %v276
        %v355 = vunpack.c.l.b16 %v277
        %v356 = vunpack.c.l.b16 %v278
        %v357 = vunpack.c.l.b16 %v279
        %v358 = vunpack.c.l.b16 %v280
        %v359 = vunpack.c.l.b16 %v281
        %v360 = vunpack.c.l.b16 %v282
        %v361 = vunpack.c.l.b16 %v283
        %v362 = vunpack.c.l.b16 %v284
        %v363 = vunpack.c.l.b16 %v285
        %v364 = vunpack.c.l.b16 %v286
        %v365 = vunpack.c.l.b16 %v287
        %v366 = vunpack.c.l.b16 %v288
        %v367 = vunpack.c.l.b16 %v289
        %v368 = vunpack.c.l.b16 %v290
        %v369 = vunpack.c.l.b16 %v291
        %v370 = vunpack.c.l.b16 %v292
        %v371 = vunpack.c.l.b16 %v293
        %v372 = vunpack.c.l.b16 %v294
        %v373 = vunpack.c.l.b16 %v295
        %v374 = vunpack.c.l.b16 %v296
        %v375 = vunpack.c.l.b16 %v297
        %v376 = vunpack.c.l.b16 %v298
        %v377 = vunpack.c.l.b16 %v299
        %v378 = vunpack.c.l.b16 %v300
        %v379 = vunpack.c.l.b16 %v301
        %v380 = vunpack.c.l.b16 %v302
        %v381 = vunpack.c.l.b16 %v303
        %v382 = vpack.c.b16 %v351, %v350
        %v383 = vpack.c.b16 %v353, %v352
        %v384 = vpack.c.b16 %v355, %v354
        %v385 = vpack.c.b16 %v357, %v356
        %v386 = vpack.c.b16 %v359, %v358
        %v387 = vpack.c.b16 %v361, %v360
        %v388 = vpack.c.b16 %v363, %v362
        %v389 = vpack.c.b16 %v365, %v364
        %v390 = vpack.c.b16 %v367, %v366
        %v391 = vpack.c.b16 %v369, %v368
        %v392 = vpack.c.b16 %v371, %v370
        %v393 = vpack.c.b16 %v373, %v372
        %v394 = vpack.c.b16 %v375, %v374
        %v395 = vpack.c.b16 %v377, %v376
        %v396 = vpack.c.b16 %v379, %v378
        %v397 = vpack.c.b16 %v381, %v380
        %414 = vmatprep.subr.bf16.mxu0 0
        %415 = vmatpush1.bf16.msra.mxu0 %v382
        %416 = vmatprep.subr.bf16.mxu0 0
        %417 = vmatpush1.bf16.msra.mxu0 %v383
        %418 = vmatprep.subr.bf16.mxu0 0
        %419 = vmatpush1.bf16.msra.mxu0 %v384
        %420 = vmatprep.subr.bf16.mxu0 0
        %421 = vmatpush1.bf16.msra.mxu0 %v385
        %422 = vmatprep.subr.bf16.mxu0 0
        %423 = vmatpush1.bf16.msra.mxu0 %v386
        %424 = vmatprep.subr.bf16.mxu0 0
        %425 = vmatpush1.bf16.msra.mxu0 %v387
        %426 = vmatprep.subr.bf16.mxu0 0
        %427 = vmatpush1.bf16.msra.mxu0 %v388
        %428 = vmatprep.subr.bf16.mxu0 0
        %429 = vmatpush1.bf16.msra.mxu0 %v389
        %430 = vmatprep.subr.bf16.mxu0 0
        %431 = vmatpush1.bf16.msra.mxu0 %v390
        %432 = vmatprep.subr.bf16.mxu0 0
        %433 = vmatpush1.bf16.msra.mxu0 %v391
        %434 = vmatprep.subr.bf16.mxu0 0
        %435 = vmatpush1.bf16.msra.mxu0 %v392
        %436 = vmatprep.subr.bf16.mxu0 0
        %437 = vmatpush1.bf16.msra.mxu0 %v393
        %438 = vmatprep.subr.bf16.mxu0 0
        %439 = vmatpush1.bf16.msra.mxu0 %v394
        %440 = vmatprep.subr.bf16.mxu0 0
        %441 = vmatpush1.bf16.msra.mxu0 %v395
        %442 = vmatprep.subr.bf16.mxu0 0
        %443 = vmatpush1.bf16.msra.mxu0 %v396
        %444 = vmatprep.subr.bf16.mxu0 0
        %445 = vmatpush1.bf16.msra.mxu0 %v397
        %446 = vmatprep.mubr.bf16.mxu0 %v315
        %447 = vmatmul.mubr.bf16.gmra.mrb[0].mxu0 %v314
        %v448 = vpop.f32.mrb[0].mxu0
        %v449 = vadd.f32 %v309, %v448
        %v450 = vpop.f32.mrb[0].mxu0
        %v451 = vpop.f32.mrb[0].mxu0
        %v452 = vpop.f32.mrb[0].mxu0
        %453 = vdwg.mxu0
        %v454 = vmax.f32 %v449, 0.0
        %v455 = vpack.c.bf16 %v454, %v454
        %v456 = vld [vmem:[#allocation7] sm:$0xf]
        %v457 = vld [vmem:[#allocation7 + $0x4] sm:$0xf]
        %v458 = vld [vmem:[#allocation7 + $0x8] sm:$0xf]
        %v459 = vld [vmem:[#allocation7 + $0xc] sm:$0xf]
        %v460 = vld [vmem:[#allocation7 + $0x10] sm:$0xf]
        %v461 = vld [vmem:[#allocation7 + $0x14] sm:$0xf]
        %v462 = vld [vmem:[#allocation7 + $0x18] sm:$0xf]
        %v463 = vld [vmem:[#allocation7 + $0x1c] sm:$0xf]
        %v464 = vld [vmem:[#allocation7 + $0x20] sm:$0xf]
        %v465 = vld [vmem:[#allocation7 + $0x24] sm:$0xf]
        %v466 = vld [vmem:[#allocation7 + $0x28] sm:$0xf]
        %v467 = vld [vmem:[#allocation7 + $0x2c] sm:$0xf]
        %v468 = vld [vmem:[#allocation7 + $0x30] sm:$0xf]
        %v469 = vld [vmem:[#allocation7 + $0x34] sm:$0xf]
        %v470 = vld [vmem:[#allocation7 + $0x38] sm:$0xf]
        %v471 = vld [vmem:[#allocation7 + $0x3c] sm:$0xf]
        %v472 = vld [vmem:[%s4] sm:$0x1]
        %v474 = vlaneseq
        %v475 = vshrl.u32 %v474, 7
        %v476 = vsub.s32 0, %v475
        %v477 = vrot.slane %v472, %v476
        %v495 = vunpack.c.l.b16 %v456
        %v496 = vunpack.c.l.b16 %v457
        %v497 = vunpack.c.l.b16 %v458
        %v498 = vunpack.c.l.b16 %v459
        %v499 = vunpack.c.l.b16 %v460
        %v500 = vunpack.c.l.b16 %v461
        %v501 = vunpack.c.l.b16 %v462
        %v502 = vunpack.c.l.b16 %v463
        %v503 = vunpack.c.l.b16 %v464
        %v504 = vunpack.c.l.b16 %v465
        %v505 = vunpack.c.l.b16 %v466
        %v506 = vunpack.c.l.b16 %v467
        %v507 = vunpack.c.l.b16 %v468
        %v508 = vunpack.c.l.b16 %v469
        %v509 = vunpack.c.l.b16 %v470
        %v510 = vunpack.c.l.b16 %v471
        %v511 = vpack.c.b16 %v496, %v495
        %v512 = vpack.c.b16 %v498, %v497
        %v513 = vpack.c.b16 %v500, %v499
        %v514 = vpack.c.b16 %v502, %v501
        %v515 = vpack.c.b16 %v504, %v503
        %v516 = vpack.c.b16 %v506, %v505
        %v517 = vpack.c.b16 %v508, %v507
        %v518 = vpack.c.b16 %v510, %v509
        %527 = vmatprep.subr.bf16.mxu0 0
        %528 = vmatpush1.bf16.msra.mxu0 %v511
        %529 = vmatprep.subr.bf16.mxu0 0
        %530 = vmatpush1.bf16.msra.mxu0 %v512
        %531 = vmatprep.subr.bf16.mxu0 0
        %532 = vmatpush1.bf16.msra.mxu0 %v513
        %533 = vmatprep.subr.bf16.mxu0 0
        %534 = vmatpush1.bf16.msra.mxu0 %v514
        %535 = vmatprep.subr.bf16.mxu0 0
        %536 = vmatpush1.bf16.msra.mxu0 %v515
        %537 = vmatprep.subr.bf16.mxu0 0
        %538 = vmatpush1.bf16.msra.mxu0 %v516
        %539 = vmatprep.subr.bf16.mxu0 0
        %540 = vmatpush1.bf16.msra.mxu0 %v517
        %541 = vmatprep.subr.bf16.mxu0 0
        %542 = vmatpush1.bf16.msra.mxu0 %v518
        %543 = vmatprep.subr.bf16.mxu0 0
        %544 = vmatpush1.bf16.msra.mxu0 0
        %545 = vmatprep.subr.bf16.mxu0 0
        %546 = vmatpush1.bf16.msra.mxu0 0
        %547 = vmatprep.subr.bf16.mxu0 0
        %548 = vmatpush1.bf16.msra.mxu0 0
        %549 = vmatprep.subr.bf16.mxu0 0
        %550 = vmatpush1.bf16.msra.mxu0 0
        %551 = vmatprep.subr.bf16.mxu0 0
        %552 = vmatpush1.bf16.msra.mxu0 0
        %553 = vmatprep.subr.bf16.mxu0 0
        %554 = vmatpush1.bf16.msra.mxu0 0
        %555 = vmatprep.subr.bf16.mxu0 0
        %556 = vmatpush1.bf16.msra.mxu0 0
        %557 = vmatprep.subr.bf16.mxu0 0
        %558 = vmatpush1.bf16.msra.mxu0 0
        %559 = vmatprep.mubr.bf16.mxu0 0
        %560 = vmatmul.mubr.bf16.gmra.mrb[0].mxu0 %v455
        %v561 = vpop.f32.mrb[0].mxu0
        %v562 = vadd.f32 %v477, %v561
        %v563 = vpop.f32.mrb[0].mxu0
        %v564 = vpop.f32.mrb[0].mxu0
        %v565 = vpop.f32.mrb[0].mxu0
        %566 = vdwg.mxu0
        %567 = vst [vmem:[%s269] sm:$0xff] %v562
        %s568 = sand.u32 %s141, 1
        %s569 = scalar_lea.sflag [#allocation4], %s568
        %s570 = sand.u32 %s141, 1
        %s571 = smul.addr %s570, 8
        %s572 = scalar_lea.vmem [#allocation8], %s571
        // Predicated region
        $region53: #{tpu_custom_call.1} parent=39 // pred_check
          %p573 = pneg %p151
        $region54: #{tpu_custom_call.1} parent=39 // pred_check_branch
          %575 = sbr.rel (%p573) target = $region56
        $region55: #{tpu_custom_call.1} parent=39 // pred_region
          %s577 = ssub.s32 128, 128
          %578 = vsyncadd %s569, %s577
          %s579 = smul.addr %s23, 128
          %s580 = scalar_lea.hbm %s5, %s579
          %s582 = sshll.u32 %s572, 4
          %s583 = int_to_ptr.vmem [resolvable:$true] %s582
          %585 = dma.vmem_to_hbm [thread:$0]  %s583, 128, %s580, %s569
        $region56: #{tpu_custom_call.1} parent=39 // pred_fallthru
          _
      $region40: #{tpu_custom_call.1} parent=5 // pred_fallthru
        _
      %p586 = scmp.le.s32.totalorder 2, %s18
      // Predicated region
      $region57: #{tpu_custom_call.1} parent=5 // pred_check
        %p587 = pneg %p586
      $region58: #{tpu_custom_call.1} parent=5 // pred_check_branch
        %589 = sbr.rel (%p587) target = $region60
      $region59: #{tpu_custom_call.1} parent=5 // pred_region
        %s590 = ssub.s32 %s18, 2
        // Predicated region
        $region61: #{tpu_custom_call.1} parent=59 // pred_check
          %p591 = pneg %p157
        $region62: #{tpu_custom_call.1} parent=59 // pred_check_branch
          %593 = sbr.rel (%p591) target = $region64
        $region63: #{tpu_custom_call.1} parent=59 // pred_region
          %s594 = sand.u32 %s142, 1
          %s595 = scalar_lea.sflag [#allocation4], %s594
          %s596 = sand.u32 %s142, 1
          %s597 = smul.addr %s596, 8
          %s598 = scalar_lea.vmem [#allocation8], %s597
          %599 = dma.done %s595, 128
        $region64: #{tpu_custom_call.1} parent=59 // pred_fallthru
          _
      $region60: #{tpu_custom_call.1} parent=5 // pred_fallthru
        _
    $region6: #{tpu_custom_call.1} parent=1 // loop_footer
      %s22 = sadd.s32 1, %s18
    $region7: #{tpu_custom_call.1} parent=1 // loop_footer_branch
      %17 = sbr.rel target = $region3
    $region8: #{tpu_custom_call.1} parent=1 // loop_exit
      _
    %600 = vsyncpa [#allocation3], 1
    %s601 = scalar_lea.sflag [#allocation3], 1
    %602 = vsyncpa %s601, 1
    %603 = vsyncpa [#allocation6], 1
    %604 = vsyncpa [#allocation4], 1
    %s605 = scalar_lea.sflag [#allocation4], 1
    %606 = vsyncpa %s605, 1

// kernel: tpu_custom_call.1
$region0: #{tpu_custom_call.1}
  #allocation0 [shape = 'u32[]', space=smem, size = 0x4, offset = 0x4, fixed_abs, tag = 'smem constant byte address 0x4 - core index']
  #allocation1 [shape = 'u32[144,128]{1,0:T(1,128)}', space=vmem, size = 0x12000, scoped, tag = 'internal scratch']
  %s0 = inlined_call_operand.hbm [shape: bf16[16,256], index: 0, kind: input, shape index: {}]
  %s1 = inlined_call_operand.hbm [shape: bf16[256,128], index: 1, kind: input, shape index: {}]
  %s2 = inlined_call_operand.vmem [shape: f32[1,128], index: 2, kind: input, shape index: {}]
  %s3 = inlined_call_operand.hbm [shape: bf16[128,128], index: 3, kind: input, shape index: {}]
  %s4 = inlined_call_operand.vmem [shape: f32[1,128], index: 4, kind: input, shape index: {}]
  %s5 = inlined_call_operand.hbm [shape: f32[16,128], index: 5, kind: output, shape index: {}]
  %s6 = sld [smem:[#allocation0]]
  $region65: #{tpu_custom_call.1} parent=0
    _
  %s8 = ssub.s32 1, %s6
  %s9 = scalar_select 0, %s8, %s6
  $region1: #{tpu_custom_call.1} parent=0
    #allocation2 [shape = 'u8[8192]{0}', space=vmem, size = 0x2000, scoped, tag = 'input window, operand 0']
    #allocation3 [shape = 's32[2]{0}', space=sflag, size = 0x8, scoped, tag = 'scoped memory for tpu_custom_call.1']
    #allocation4 [shape = 's32[2]{0}', space=sflag, size = 0x8, scoped, tag = 'scoped memory for tpu_custom_call.1']
    #allocation5 [shape = 'u8[65536]{0}', space=vmem, size = 0x10000, scoped, tag = 'input window, operand 1, single buffered']
    #allocation6 [shape = 's32[1]{0}', space=sflag, size = 0x4, scoped, tag = 'scoped memory for tpu_custom_call.1']
    #allocation7 [shape = 'u8[32768]{0}', space=vmem, size = 0x8000, scoped, tag = 'input window, operand 3, single buffered']
    #allocation8 [shape = 'u8[8192]{0}', space=vmem, size = 0x2000, scoped, tag = 'output window, operand 0']
    %10 = vsyncpa [#allocation3], 0
    %s11 = scalar_lea.sflag [#allocation3], 1
    %12 = vsyncpa %s11, 0
    %13 = vsyncpa [#allocation6], 0
    %14 = vsyncpa [#allocation4], 0
    %s15 = scalar_lea.sflag [#allocation4], 1
    %16 = vsyncpa %s15, 0
    loop: start=0, step=1, limit=4
    $region2: #{tpu_custom_call.1} parent=1 // loop_pre_header
      _
    $region3: #{tpu_custom_call.1} parent=1 // loop_header
      %s18 = sphi 0, %s22
      %p19 = scmp.ge.s32.totalorder %s18, 4
      %s28 = sphi 0, %s30
      %s31 = sphi 0, %s28
      %s32 = sphi 0, %s31
      %s48 = sphi 0, %s32
      %s52 = sphi 0, %s52
      %s54 = sphi 0, %s52
      %s55 = sphi 0, %s54
      %s69 = sphi 0, %s55
      %s73 = sphi 0, %s73
      %s75 = sphi 0, %s73
      %s76 = sphi 0, %s75
      %s90 = sphi 0, %s76
      %s94 = sphi 0, %s94
      %s96 = sphi 0, %s94
      %s97 = sphi 0, %s96
      %s111 = sphi 0, %s97
      %s115 = sphi 0, %s115
      %s117 = sphi 0, %s115
      %s118 = sphi 0, %s117
      %s132 = sphi 0, %s118
      %s138 = sphi 0, %s140
      %s141 = sphi 0, %s138
      %s142 = sphi 0, %s141
      %s158 = sphi 0, %s142
    $region4: #{tpu_custom_call.1} parent=1 // loop_header_branch
      %21 = sbr.rel (%p19) target = $region8
    $region5: #{tpu_custom_call.1} parent=1 // loop_body
      %s23 = ssub.s32 %s18, 1
      %s24 = ssub.s32 %s18, 2
      %s25 = sadd.s32 %s18, 1
      %s26 = ssub.s32 %s18, %s25
      %p27 = scmp.eq.s32.totalorder %s26, 0
      %s29 = sadd.s32 %s28, 1
      %s30 = scalar_select %p27, %s28, %s29
      %p33 = pneg %p27
      %p34 = scmp.eq.s32.totalorder %s18, 1
      %p35 = por %p33, %p34
      %p36 = scmp.ne.s32.totalorder %s28, %s31
      %p37 = scmp.eq.s32.totalorder %s18, 0
      %p38 = por %p36, %p37
      %p39 = scmp.ne.s32.totalorder %s28, %s31
      %p40 = scmp.eq.s32.totalorder %s23, 1
      %p41 = por %p39, %p40
      %p42 = scmp.ne.s32.totalorder %s31, %s32
      %p43 = scmp.eq.s32.totalorder %s23, 0
      %p44 = por %p42, %p43
      %p45 = scmp.ne.s32.totalorder %s31, %s32
      %p46 = scmp.eq.s32.totalorder %s24, 1
      %p47 = por %p45, %p46
      %p49 = scmp.ne.s32.totalorder %s32, %s48
      %p50 = scmp.eq.s32.totalorder %s24, 0
      %p51 = por %p49, %p50
      %s53 = sadd.s32 %s52, 1
      %p56 = scmp.eq.s32.totalorder %s18, 1
      %p57 = scmp.ne.s32.totalorder %s52, %s54
      %p58 = scmp.eq.s32.totalorder %s18, 0
      %p59 = por %p57, %p58
      %p60 = scmp.ne.s32.totalorder %s52, %s54
      %p61 = scmp.eq.s32.totalorder %s23, 1
      %p62 = por %p60, %p61
      %p63 = scmp.ne.s32.totalorder %s54, %s55
      %p64 = scmp.eq.s32.totalorder %s23, 0
      %p65 = por %p63, %p64
      %p66 = scmp.ne.s32.totalorder %s54, %s55
      %p67 = scmp.eq.s32.totalorder %s24, 1
      %p68 = por %p66, %p67
      %p70 = scmp.ne.s32.totalorder %s55, %s69
      %p71 = scmp.eq.s32.totalorder %s24, 0
      %p72 = por %p70, %p71
      %s74 = sadd.s32 %s73, 1
      %p77 = scmp.eq.s32.totalorder %s18, 1
      %p78 = scmp.ne.s32.totalorder %s73, %s75
      %p79 = scmp.eq.s32.totalorder %s18, 0
      %p80 = por %p78, %p79
      %p81 = scmp.ne.s32.totalorder %s73, %s75
      %p82 = scmp.eq.s32.totalorder %s23, 1
      %p83 = por %p81, %p82
      %p84 = scmp.ne.s32.totalorder %s75, %s76
      %p85 = scmp.eq.s32.totalorder %s23, 0
      %p86 = por %p84, %p85
      %p87 = scmp.ne.s32.totalorder %s75, %s76
      %p88 = scmp.eq.s32.totalorder %s24, 1
      %p89 = por %p87, %p88
      %p91 = scmp.ne.s32.totalorder %s76, %s90
      %p92 = scmp.eq.s32.totalorder %s24, 0
      %p93 = por %p91, %p92
      %s95 = sadd.s32 %s94, 1
      %p98 = scmp.eq.s32.totalorder %s18, 1
      %p99 = scmp.ne.s32.totalorder %s94, %s96
      %p100 = scmp.eq.s32.totalorder %s18, 0
      %p101 = por %p99, %p100
      %p102 = scmp.ne.s32.totalorder %s94, %s96
      %p103 = scmp.eq.s32.totalorder %s23, 1
      %p104 = por %p102, %p103
      %p105 = scmp.ne.s32.totalorder %s96, %s97
      %p106 = scmp.eq.s32.totalorder %s23, 0
      %p107 = por %p105, %p106
      %p108 = scmp.ne.s32.totalorder %s96, %s97
      %p109 = scmp.eq.s32.totalorder %s24, 1
      %p110 = por %p108, %p109
      %p112 = scmp.ne.s32.totalorder %s97, %s111
      %p113 = scmp.eq.s32.totalorder %s24, 0
      %p114 = por %p112, %p113
      %s116 = sadd.s32 %s115, 1
      %p119 = scmp.eq.s32.totalorder %s18, 1
      %p120 = scmp.ne.s32.totalorder %s115, %s117
      %p121 = scmp.eq.s32.totalorder %s18, 0
      %p122 = por %p120, %p121
      %p123 = scmp.ne.s32.totalorder %s115, %s117
      %p124 = scmp.eq.s32.totalorder %s23, 1
      %p125 = por %p123, %p124
      %p126 = scmp.ne.s32.totalorder %s117, %s118
      %p127 = scmp.eq.s32.totalorder %s23, 0
      %p128 = por %p126, %p127
      %p129 = scmp.ne.s32.totalorder %s117, %s118
      %p130 = scmp.eq.s32.totalorder %s24, 1
      %p131 = por %p129, %p130
      %p133 = scmp.ne.s32.totalorder %s118, %s132
      %p134 = scmp.eq.s32.totalorder %s24, 0
      %p135 = por %p133, %p134
      %s136 = ssub.s32 %s18, %s25
      %p137 = scmp.eq.s32.totalorder %s136, 0
      %s139 = sadd.s32 %s138, 1
      %s140 = scalar_select %p137, %s138, %s139
      %p143 = pneg %p137
      %p144 = scmp.eq.s32.totalorder %s18, 1
      %p145 = por %p143, %p144
      %p146 = scmp.ne.s32.totalorder %s138, %s141
      %p147 = scmp.eq.s32.totalorder %s18, 0
      %p148 = por %p146, %p147
      %p149 = scmp.ne.s32.totalorder %s138, %s141
      %p150 = scmp.eq.s32.totalorder %s23, 1
      %p151 = por %p149, %p150
      %p152 = scmp.ne.s32.totalorder %s141, %s142
      %p153 = scmp.eq.s32.totalorder %s23, 0
      %p154 = por %p152, %p153
      %p155 = scmp.ne.s32.totalorder %s141, %s142
      %p156 = scmp.eq.s32.totalorder %s24, 1
      %p157 = por %p155, %p156
      %p159 = scmp.ne.s32.totalorder %s142, %s158
      %p160 = scmp.eq.s32.totalorder %s24, 0
      %p161 = por %p159, %p160
      %p162 = scmp.le.s32.totalorder 1, %s18
      %p163 = scmp.lt.s32.totalorder %s18, 3
      %p164 = pnand %p162, %p163
      %p165 = pneg %p164
      // Predicated region
      $region9: #{tpu_custom_call.1} parent=5 // pred_check
        _
      $region10: #{tpu_custom_call.1} parent=5 // pred_check_branch
        %167 = sbr.rel (%p164) target = $region12
      $region11: #{tpu_custom_call.1} parent=5 // pred_region
        %s168 = ssub.s32 %s18, 1
        // Predicated region
        $region13: #{tpu_custom_call.1} parent=11 // pred_check
          %p169 = pneg %p65
        $region14: #{tpu_custom_call.1} parent=11 // pred_check_branch
          %171 = sbr.rel (%p169) target = $region16
        $region15: #{tpu_custom_call.1} parent=11 // pred_region
          %s173 = ssub.s32 2048, 2048
          %174 = vsyncadd [#allocation6], %s173
          %s175 = sshll.u32 [#allocation5], 4
          %s176 = int_to_ptr.vmem [resolvable:$true] %s175
          %181 = dma.hbm_to_vmem [thread:$0]  %s1, 2048, %s176, [#allocation6], 64, 64, 4
        $region16: #{tpu_custom_call.1} parent=11 // pred_fallthru
          _
        // Predicated region
        $region17: #{tpu_custom_call.1} parent=11 // pred_check
          %p182 = pneg %p86
        $region18: #{tpu_custom_call.1} parent=11 // pred_check_branch
          %184 = sbr.rel (%p182) target = $region20
        $region19: #{tpu_custom_call.1} parent=11 // pred_region
          _
        $region20: #{tpu_custom_call.1} parent=11 // pred_fallthru
          _
        // Predicated region
        $region21: #{tpu_custom_call.1} parent=11 // pred_check
          %p185 = pneg %p107
        $region22: #{tpu_custom_call.1} parent=11 // pred_check_branch
          %187 = sbr.rel (%p185) target = $region24
        $region23: #{tpu_custom_call.1} parent=11 // pred_region
          %s189 = ssub.s32 1024, 1024
          %190 = vsyncadd [#allocation6], %s189
          %s191 = sshll.u32 [#allocation7], 4
          %s192 = int_to_ptr.vmem [resolvable:$true] %s191
          %197 = dma.hbm_to_vmem [thread:$0]  %s3, 1024, %s192, [#allocation6], 64, 64, 4
        $region24: #{tpu_custom_call.1} parent=11 // pred_fallthru
          _
        // Predicated region
        $region25: #{tpu_custom_call.1} parent=11 // pred_check
          %p198 = pneg %p128
        $region26: #{tpu_custom_call.1} parent=11 // pred_check_branch
          %200 = sbr.rel (%p198) target = $region28
        $region27: #{tpu_custom_call.1} parent=11 // pred_region
          _
        $region28: #{tpu_custom_call.1} parent=11 // pred_fallthru
          _
      $region12: #{tpu_custom_call.1} parent=5 // pred_fallthru
        _
      %p201 = scmp.lt.s32.totalorder %s18, 2
      // Predicated region
      $region29: #{tpu_custom_call.1} parent=5 // pred_check
        %p202 = pneg %p201
      $region30: #{tpu_custom_call.1} parent=5 // pred_check_branch
        %204 = sbr.rel (%p202) target = $region32
      $region31: #{tpu_custom_call.1} parent=5 // pred_region
        // Predicated region
        $region33: #{tpu_custom_call.1} parent=31 // pred_check
          %p205 = pneg %p38
        $region34: #{tpu_custom_call.1} parent=31 // pred_check_branch
          %207 = sbr.rel (%p205) target = $region36
        $region35: #{tpu_custom_call.1} parent=31 // pred_region
          %s208 = sand.u32 %s28, 1
          %s209 = scalar_lea.sflag [#allocation3], %s208
          %s210 = sand.u32 %s28, 1
          %s211 = smul.addr %s210, 8
          %s212 = scalar_lea.vmem [#allocation2], %s211
          %s214 = ssub.s32 128, 128
          %215 = vsyncadd %s209, %s214
          %s216 = smul.addr %s18, 2
          %s217 = smul.addr %s216, 64
          %s218 = scalar_lea.hbm %s0, %s217
          %s220 = sshll.u32 %s212, 4
          %s221 = int_to_ptr.vmem [resolvable:$true] %s220
          %223 = dma.hbm_to_vmem [thread:$0]  %s218, 128, %s221, %s209
        $region36: #{tpu_custom_call.1} parent=31 // pred_fallthru
          _
      $region32: #{tpu_custom_call.1} parent=5 // pred_fallthru
        _
      %p224 = scmp.le.s32.totalorder 1, %s18
      %p225 = scmp.lt.s32.totalorder %s18, 3
      %p226 = pnand %p224, %p225
      %p227 = pneg %p226
      // Predicated region
      $region37: #{tpu_custom_call.1} parent=5 // pred_check
        _
      $region38: #{tpu_custom_call.1} parent=5 // pred_check_branch
        %229 = sbr.rel (%p226) target = $region40
      $region39: #{tpu_custom_call.1} parent=5 // pred_region
        %s230 = ssub.s32 %s18, 1
        %s231 = sand.u32 %s31, 1
        %s232 = scalar_lea.sflag [#allocation3], %s231
        %s233 = sand.u32 %s31, 1
        %s234 = smul.addr %s233, 8
        %s235 = scalar_lea.vmem [#allocation2], %s234
        // Predicated region
        $region41: #{tpu_custom_call.1} parent=39 // pred_check
          %p236 = pneg %p44
        $region42: #{tpu_custom_call.1} parent=39 // pred_check_branch
          %238 = sbr.rel (%p236) target = $region44
        $region43: #{tpu_custom_call.1} parent=39 // pred_region
          %239 = dma.done %s232, 128
        $region44: #{tpu_custom_call.1} parent=39 // pred_fallthru
          _
        // Predicated region
        $region45: #{tpu_custom_call.1} parent=39 // pred_check
          %p240 = pneg %p65
        $region46: #{tpu_custom_call.1} parent=39 // pred_check_branch
          %242 = sbr.rel (%p240) target = $region48
        $region47: #{tpu_custom_call.1} parent=39 // pred_region
          %243 = dma.done [#allocation6], 2048
        $region48: #{tpu_custom_call.1} parent=39 // pred_fallthru
          _
        // Predicated region
        $region49: #{tpu_custom_call.1} parent=39 // pred_check
          %p244 = pneg %p107
        $region50: #{tpu_custom_call.1} parent=39 // pred_check_branch
          %246 = sbr.rel (%p244) target = $region52
        $region51: #{tpu_custom_call.1} parent=39 // pred_region
          %247 = dma.done [#allocation6], 1024
        $region52: #{tpu_custom_call.1} parent=39 // pred_fallthru
          _
        %s248 = sand.u32 %s31, 1
        %s249 = scalar_lea.sflag [#allocation3], %s248
        %s250 = sand.u32 %s31, 1
        %s251 = smul.addr %s250, 8
        %s252 = scalar_lea.vmem [#allocation2], %s251
        %p253 = pneg %p44
        %p254 = pneg %p41
        %p255 = pneg %p65
        %p256 = pneg %p62
        %p257 = pneg %p86
        %p258 = pneg %p83
        %p259 = pneg %p107
        %p260 = pneg %p104
        %p261 = pneg %p128
        %p262 = pneg %p125
        %p263 = pneg %p154
        %p264 = pneg %p151
        %s265 = sand.u32 %s141, 1
        %s266 = scalar_lea.sflag [#allocation4], %s265
        %s267 = sand.u32 %s141, 1
        %s268 = smul.addr %s267, 8
        %s269 = scalar_lea.vmem [#allocation8], %s268
        %v271 = vld [vmem:[%s235] sm:$0xff]
        %v272 = vld [vmem:[#allocation5] sm:$0xf]
        %v273 = vld [vmem:[#allocation5 + $0x4] sm:$0xf]
        %v274 = vld [vmem:[#allocation5 + $0x8] sm:$0xf]
        %v275 = vld [vmem:[#allocation5 + $0xc] sm:$0xf]
        %v276 = vld [vmem:[#allocation5 + $0x10] sm:$0xf]
        %v277 = vld [vmem:[#allocation5 + $0x14] sm:$0xf]
        %v278 = vld [vmem:[#allocation5 + $0x18] sm:$0xf]
        %v279 = vld [vmem:[#allocation5 + $0x1c] sm:$0xf]
        %v280 = vld [vmem:[#allocation5 + $0x20] sm:$0xf]
        %v281 = vld [vmem:[#allocation5 + $0x24] sm:$0xf]
        %v282 = vld [vmem:[#allocation5 + $0x28] sm:$0xf]
        %v283 = vld [vmem:[#allocation5 + $0x2c] sm:$0xf]
        %v284 = vld [vmem:[#allocation5 + $0x30] sm:$0xf]
        %v285 = vld [vmem:[#allocation5 + $0x34] sm:$0xf]
        %v286 = vld [vmem:[#allocation5 + $0x38] sm:$0xf]
        %v287 = vld [vmem:[#allocation5 + $0x3c] sm:$0xf]
        %v288 = vld [vmem:[#allocation5 + $0x40] sm:$0xf]
        %v289 = vld [vmem:[#allocation5 + $0x44] sm:$0xf]
        %v290 = vld [vmem:[#allocation5 + $0x48] sm:$0xf]
        %v291 = vld [vmem:[#allocation5 + $0x4c] sm:$0xf]
        %v292 = vld [vmem:[#allocation5 + $0x50] sm:$0xf]
        %v293 = vld [vmem:[#allocation5 + $0x54] sm:$0xf]
        %v294 = vld [vmem:[#allocation5 + $0x58] sm:$0xf]
        %v295 = vld [vmem:[#allocation5 + $0x5c] sm:$0xf]
        %v296 = vld [vmem:[#allocation5 + $0x60] sm:$0xf]
        %v297 = vld [vmem:[#allocation5 + $0x64] sm:$0xf]
        %v298 = vld [vmem:[#allocation5 + $0x68] sm:$0xf]
        %v299 = vld [vmem:[#allocation5 + $0x6c] sm:$0xf]
        %v300 = vld [vmem:[#allocation5 + $0x70] sm:$0xf]
        %v301 = vld [vmem:[#allocation5 + $0x74] sm:$0xf]
        %v302 = vld [vmem:[#allocation5 + $0x78] sm:$0xf]
        %v303 = vld [vmem:[#allocation5 + $0x7c] sm:$0xf]
        %v304 = vld [vmem:[%s2] sm:$0x1]
        %v306 = vlaneseq
        %v307 = vshrl.u32 %v306, 7
        %v308 = vsub.s32 0, %v307
        %v309 = vrot.slane %v304, %v308
        %v312 = vunpack.c.l.b16 %v271
        %v313 = vunpack.c.h.b16 %v271
        %v314 = vpack.c.b16 %v312, %v312
        %v315 = vpack.c.b16 %v313, %v313
        %v350 = vunpack.c.l.b16 %v272
        %v351 = vunpack.c.l.b16 %v273
        %v352 = vunpack.c.l.b16 %v274
        %v353 = vunpack.c.l.b16 %v275
        %v354 = vunpack.c.l.b16 %v276
        %v355 = vunpack.c.l.b16 %v277
        %v356 = vunpack.c.l.b16 %v278
        %v357 = vunpack.c.l.b16 %v279
        %v358 = vunpack.c.l.b16 %v280
        %v359 = vunpack.c.l.b16 %v281
        %v360 = vunpack.c.l.b16 %v282
        %v361 = vunpack.c.l.b16 %v283
        %v362 = vunpack.c.l.b16 %v284
        %v363 = vunpack.c.l.b16 %v285
        %v364 = vunpack.c.l.b16 %v286
        %v365 = vunpack.c.l.b16 %v287
        %v366 = vunpack.c.l.b16 %v288
        %v367 = vunpack.c.l.b16 %v289
        %v368 = vunpack.c.l.b16 %v290
        %v369 = vunpack.c.l.b16 %v291
        %v370 = vunpack.c.l.b16 %v292
        %v371 = vunpack.c.l.b16 %v293
        %v372 = vunpack.c.l.b16 %v294
        %v373 = vunpack.c.l.b16 %v295
        %v374 = vunpack.c.l.b16 %v296
        %v375 = vunpack.c.l.b16 %v297
        %v376 = vunpack.c.l.b16 %v298
        %v377 = vunpack.c.l.b16 %v299
        %v378 = vunpack.c.l.b16 %v300
        %v379 = vunpack.c.l.b16 %v301
        %v380 = vunpack.c.l.b16 %v302
        %v381 = vunpack.c.l.b16 %v303
        %v382 = vpack.c.b16 %v351, %v350
        %v383 = vpack.c.b16 %v353, %v352
        %v384 = vpack.c.b16 %v355, %v354
        %v385 = vpack.c.b16 %v357, %v356
        %v386 = vpack.c.b16 %v359, %v358
        %v387 = vpack.c.b16 %v361, %v360
        %v388 = vpack.c.b16 %v363, %v362
        %v389 = vpack.c.b16 %v365, %v364
        %v390 = vpack.c.b16 %v367, %v366
        %v391 = vpack.c.b16 %v369, %v368
        %v392 = vpack.c.b16 %v371, %v370
        %v393 = vpack.c.b16 %v373, %v372
        %v394 = vpack.c.b16 %v375, %v374
        %v395 = vpack.c.b16 %v377, %v376
        %v396 = vpack.c.b16 %v379, %v378
        %v397 = vpack.c.b16 %v381, %v380
        %414 = vmatprep.subr.bf16.mxu0 0
        %415 = vmatpush1.bf16.msra.mxu0 %v382
        %416 = vmatprep.subr.bf16.mxu0 0
        %417 = vmatpush1.bf16.msra.mxu0 %v383
        %418 = vmatprep.subr.bf16.mxu0 0
        %419 = vmatpush1.bf16.msra.mxu0 %v384
        %420 = vmatprep.subr.bf16.mxu0 0
        %421 = vmatpush1.bf16.msra.mxu0 %v385
        %422 = vmatprep.subr.bf16.mxu0 0
        %423 = vmatpush1.bf16.msra.mxu0 %v386
        %424 = vmatprep.subr.bf16.mxu0 0
        %425 = vmatpush1.bf16.msra.mxu0 %v387
        %426 = vmatprep.subr.bf16.mxu0 0
        %427 = vmatpush1.bf16.msra.mxu0 %v388
        %428 = vmatprep.subr.bf16.mxu0 0
        %429 = vmatpush1.bf16.msra.mxu0 %v389
        %430 = vmatprep.subr.bf16.mxu0 0
        %431 = vmatpush1.bf16.msra.mxu0 %v390
        %432 = vmatprep.subr.bf16.mxu0 0
        %433 = vmatpush1.bf16.msra.mxu0 %v391
        %434 = vmatprep.subr.bf16.mxu0 0
        %435 = vmatpush1.bf16.msra.mxu0 %v392
        %436 = vmatprep.subr.bf16.mxu0 0
        %437 = vmatpush1.bf16.msra.mxu0 %v393
        %438 = vmatprep.subr.bf16.mxu0 0
        %439 = vmatpush1.bf16.msra.mxu0 %v394
        %440 = vmatprep.subr.bf16.mxu0 0
        %441 = vmatpush1.bf16.msra.mxu0 %v395
        %442 = vmatprep.subr.bf16.mxu0 0
        %443 = vmatpush1.bf16.msra.mxu0 %v396
        %444 = vmatprep.subr.bf16.mxu0 0
        %445 = vmatpush1.bf16.msra.mxu0 %v397
        %446 = vmatprep.mubr.bf16.mxu0 %v315
        %447 = vmatmul.mubr.bf16.gmra.mrb[0].mxu0 %v314
        %v448 = vpop.f32.mrb[0].mxu0
        %v449 = vadd.f32 %v309, %v448
        %v450 = vpop.f32.mrb[0].mxu0
        %v451 = vpop.f32.mrb[0].mxu0
        %v452 = vpop.f32.mrb[0].mxu0
        %453 = vdwg.mxu0
        %v454 = vmax.f32 %v449, 0.0
        %v455 = vpack.c.bf16 %v454, %v454
        %v456 = vld [vmem:[#allocation7] sm:$0xf]
        %v457 = vld [vmem:[#allocation7 + $0x4] sm:$0xf]
        %v458 = vld [vmem:[#allocation7 + $0x8] sm:$0xf]
        %v459 = vld [vmem:[#allocation7 + $0xc] sm:$0xf]
        %v460 = vld [vmem:[#allocation7 + $0x10] sm:$0xf]
        %v461 = vld [vmem:[#allocation7 + $0x14] sm:$0xf]
        %v462 = vld [vmem:[#allocation7 + $0x18] sm:$0xf]
        %v463 = vld [vmem:[#allocation7 + $0x1c] sm:$0xf]
        %v464 = vld [vmem:[#allocation7 + $0x20] sm:$0xf]
        %v465 = vld [vmem:[#allocation7 + $0x24] sm:$0xf]
        %v466 = vld [vmem:[#allocation7 + $0x28] sm:$0xf]
        %v467 = vld [vmem:[#allocation7 + $0x2c] sm:$0xf]
        %v468 = vld [vmem:[#allocation7 + $0x30] sm:$0xf]
        %v469 = vld [vmem:[#allocation7 + $0x34] sm:$0xf]
        %v470 = vld [vmem:[#allocation7 + $0x38] sm:$0xf]
        %v471 = vld [vmem:[#allocation7 + $0x3c] sm:$0xf]
        %v472 = vld [vmem:[%s4] sm:$0x1]
        %v474 = vlaneseq
        %v475 = vshrl.u32 %v474, 7
        %v476 = vsub.s32 0, %v475
        %v477 = vrot.slane %v472, %v476
        %v495 = vunpack.c.l.b16 %v456
        %v496 = vunpack.c.l.b16 %v457
        %v497 = vunpack.c.l.b16 %v458
        %v498 = vunpack.c.l.b16 %v459
        %v499 = vunpack.c.l.b16 %v460
        %v500 = vunpack.c.l.b16 %v461
        %v501 = vunpack.c.l.b16 %v462
        %v502 = vunpack.c.l.b16 %v463
        %v503 = vunpack.c.l.b16 %v464
        %v504 = vunpack.c.l.b16 %v465
        %v505 = vunpack.c.l.b16 %v466
        %v506 = vunpack.c.l.b16 %v467
        %v507 = vunpack.c.l.b16 %v468
        %v508 = vunpack.c.l.b16 %v469
        %v509 = vunpack.c.l.b16 %v470
        %v510 = vunpack.c.l.b16 %v471
        %v511 = vpack.c.b16 %v496, %v495
        %v512 = vpack.c.b16 %v498, %v497
        %v513 = vpack.c.b16 %v500, %v499
        %v514 = vpack.c.b16 %v502, %v501
        %v515 = vpack.c.b16 %v504, %v503
        %v516 = vpack.c.b16 %v506, %v505
        %v517 = vpack.c.b16 %v508, %v507
        %v518 = vpack.c.b16 %v510, %v509
        %527 = vmatprep.subr.bf16.mxu0 0
        %528 = vmatpush1.bf16.msra.mxu0 %v511
        %529 = vmatprep.subr.bf16.mxu0 0
        %530 = vmatpush1.bf16.msra.mxu0 %v512
        %531 = vmatprep.subr.bf16.mxu0 0
        %532 = vmatpush1.bf16.msra.mxu0 %v513
        %533 = vmatprep.subr.bf16.mxu0 0
        %534 = vmatpush1.bf16.msra.mxu0 %v514
        %535 = vmatprep.subr.bf16.mxu0 0
        %536 = vmatpush1.bf16.msra.mxu0 %v515
        %537 = vmatprep.subr.bf16.mxu0 0
        %538 = vmatpush1.bf16.msra.mxu0 %v516
        %539 = vmatprep.subr.bf16.mxu0 0
        %540 = vmatpush1.bf16.msra.mxu0 %v517
        %541 = vmatprep.subr.bf16.mxu0 0
        %542 = vmatpush1.bf16.msra.mxu0 %v518
        %543 = vmatprep.subr.bf16.mxu0 0
        %544 = vmatpush1.bf16.msra.mxu0 0
        %545 = vmatprep.subr.bf16.mxu0 0
        %546 = vmatpush1.bf16.msra.mxu0 0
        %547 = vmatprep.subr.bf16.mxu0 0
        %548 = vmatpush1.bf16.msra.mxu0 0
        %549 = vmatprep.subr.bf16.mxu0 0
        %550 = vmatpush1.bf16.msra.mxu0 0
        %551 = vmatprep.subr.bf16.mxu0 0
        %552 = vmatpush1.bf16.msra.mxu0 0
        %553 = vmatprep.subr.bf16.mxu0 0
        %554 = vmatpush1.bf16.msra.mxu0 0
        %555 = vmatprep.subr.bf16.mxu0 0
        %556 = vmatpush1.bf16.msra.mxu0 0
        %557 = vmatprep.subr.bf16.mxu0 0
        %558 = vmatpush1.bf16.msra.mxu0 0
        %559 = vmatprep.mubr.bf16.mxu0 0
        %560 = vmatmul.mubr.bf16.gmra.mrb[0].mxu0 %v455
        %v561 = vpop.f32.mrb[0].mxu0
        %v562 = vadd.f32 %v477, %v561
        %v563 = vpop.f32.mrb[0].mxu0
        %v564 = vpop.f32.mrb[0].mxu0
        %v565 = vpop.f32.mrb[0].mxu0
        %566 = vdwg.mxu0
        %567 = vst [vmem:[%s269] sm:$0xff] %v562
        %s568 = sand.u32 %s141, 1
        %s569 = scalar_lea.sflag [#allocation4], %s568
        %s570 = sand.u32 %s141, 1
        %s571 = smul.addr %s570, 8
        %s572 = scalar_lea.vmem [#allocation8], %s571
        // Predicated region
        $region53: #{tpu_custom_call.1} parent=39 // pred_check
          %p573 = pneg %p151
        $region54: #{tpu_custom_call.1} parent=39 // pred_check_branch
          %575 = sbr.rel (%p573) target = $region56
        $region55: #{tpu_custom_call.1} parent=39 // pred_region
          %s577 = ssub.s32 128, 128
          %578 = vsyncadd %s569, %s577
          %s579 = smul.addr %s23, 128
          %s580 = scalar_lea.hbm %s5, %s579
          %s582 = sshll.u32 %s572, 4
          %s583 = int_to_ptr.vmem [resolvable:$true] %s582
          %585 = dma.vmem_to_hbm [thread:$0]  %s583, 128, %s580, %s569
        $region56: #{tpu_custom_call.1} parent=39 // pred_fallthru
          _
      $region40: #{tpu_custom_call.1} parent=5 // pred_fallthru
        _
      %p586 = scmp.le.s32.totalorder 2, %s18
      // Predicated region
      $region57: #{tpu_custom_call.1} parent=5 // pred_check
        %p587 = pneg %p586
      $region58: #{tpu_custom_call.1} parent=5 // pred_check_branch
        %589 = sbr.rel (%p587) target = $region60
      $region59: #{tpu_custom_call.1} parent=5 // pred_region
        %s590 = ssub.s32 %s18, 2
        // Predicated region
        $region61: #{tpu_custom_call.1} parent=59 // pred_check
          %p591 = pneg %p157
        $region62: #{tpu_custom_call.1} parent=59 // pred_check_branch
          %593 = sbr.rel (%p591) target = $region64
        $region63: #{tpu_custom_call.1} parent=59 // pred_region
          %s594 = sand.u32 %s142, 1
          %s595 = scalar_lea.sflag [#allocation4], %s594
          %s596 = sand.u32 %s142, 1
          %s597 = smul.addr %s596, 8
          %s598 = scalar_lea.vmem [#allocation8], %s597
          %599 = dma.done %s595, 128
        $region64: #{tpu_custom_call.1} parent=59 // pred_fallthru
          _
      $region60: #{tpu_custom_call.1} parent=5 // pred_fallthru
        _
    $region6: #{tpu_custom_call.1} parent=1 // loop_footer
      %s22 = sadd.s32 1, %s18
    $region7: #{tpu_custom_call.1} parent=1 // loop_footer_branch
      %17 = sbr.rel target = $region3
    $region8: #{tpu_custom_call.1} parent=1 // loop_exit
      _
    %600 = vsyncpa [#allocation3], 1
    %s601 = scalar_lea.sflag [#allocation3], 1
    %602 = vsyncpa %s601, 1
    %603 = vsyncpa [#allocation6], 1
    %604 = vsyncpa [#allocation4], 1
    %s605 = scalar_lea.sflag [#allocation4], 1
    %606 = vsyncpa %s605, 1

</llo_original>
